<compile_context>
chip_gen: v6e
topology: v6e:2x2x1
jax: 0.10.0
libtpu: 0.0.40
codegen_flags: <defaults>
</compile_context>

<pallas_src>
import functools

import jax
import jax.numpy as jnp
from jax.experimental import pallas as pl
from jax.experimental.pallas import tpu as pltpu

_LANE = 128       # hidden dim padded to full 128-lane vregs (weights are tiny / resident)
_ROW_ALIGN = 16   # batch-tile row alignment (bf16 packs 16 rows per sublane group)


def _round_up(n, m):
    return ((n + m - 1) // m) * m


def _sigmoid(v, approx):
    # exp lands on the EUP slot; approx reciprocal also goes to the EUP
    # (error ~2^-12, far below bf16 tolerance).  Exact reciprocal is kept for
    # the f32 validation path.
    return pl.reciprocal(1.0 + jnp.exp(-v), approx=approx)


def _generator_kernel(x_ref, w1_ref, b1_ref, w2_ref, b2_ref, w3_ref, b3_ref, o_ref,
                      *, approx_recip):
    """One batch tile of: sigmoid(sigmoid(elu(x@W1+b1)@W2+b2)@W3+b3)."""
    # Cast to the compute dtype inside the kernel (no wrapper-side pass over x).
    x = x_ref[...].astype(w1_ref.dtype)                   # (tile_b, in_dim)

    # Layer 1: Linear + ELU (alpha=1.0, PyTorch default). Accumulate in f32.
    h1 = jnp.dot(x, w1_ref[...], preferred_element_type=jnp.float32) + b1_ref[...]
    # TODO(synk): expm1 would be marginally more accurate for tiny |h|; exp(h)-1
    # is kept because its Mosaic lowering is proven and the forward delta ~1e-7.
    h1 = jnp.where(h1 > 0.0, h1, jnp.exp(h1) - 1.0)

    # Layer 2: Linear + sigmoid.  Cast activations back to the operand dtype so
    # the matmul stays on the fast (bf16) MXU path when compute dtype is bf16.
    h1 = h1.astype(w2_ref.dtype)
    h2 = _sigmoid(jnp.dot(h1, w2_ref[...], preferred_element_type=jnp.float32)
                  + b2_ref[...], approx_recip)

    # Layer 3: Linear + sigmoid (output feature dim left unpadded).
    h2 = h2.astype(w3_ref.dtype)
    h3 = jnp.dot(h2, w3_ref[...], preferred_element_type=jnp.float32) + b3_ref[...]
    o_ref[...] = _sigmoid(h3, approx_recip).astype(o_ref.dtype)


def pack_params(params, *, compute_dtype=jnp.bfloat16):
    """One-time weight packing (hoisted out of the per-call path).

    PyTorch-style params: weight (out, in), bias (out,).  Weights are
    transposed to (in, out), the hidden dim is zero-padded to a multiple of
    128 lanes, and matmul operands are cast to `compute_dtype`.  Biases stay
    f32 (added to the f32 MXU accumulator).  Input/output feature dims are
    left unpadded.

    Zero-padding is exact: padded hidden columns of h1 are elu(0)=0, padded
    hidden columns of h2 are sigmoid(0)=0.5 but hit zero-padded rows of W3,
    contributing 0 to the output.
    """
    hid, in_dim = params["w1"].shape
    out_dim = params["w3"].shape[0]
    hid_p = _round_up(hid, _LANE)

    def pad_t(w, rows, cols):
        wt = w.T
        return jnp.pad(wt, ((0, rows - wt.shape[0]), (0, cols - wt.shape[1])))

    return {
        "w1": pad_t(params["w1"], in_dim, hid_p).astype(compute_dtype),
        "b1": jnp.pad(params["b1"], (0, hid_p - hid)).reshape(1, hid_p).astype(jnp.float32),
        "w2": pad_t(params["w2"], hid_p, hid_p).astype(compute_dtype),
        "b2": jnp.pad(params["b2"], (0, hid_p - hid)).reshape(1, hid_p).astype(jnp.float32),
        "w3": pad_t(params["w3"], hid_p, out_dim).astype(compute_dtype),
        "b3": params["b3"].reshape(1, out_dim).astype(jnp.float32),
    }


def generator_forward(x, packed, *, tile_b=None):
    """x: (B, input_size) f32.  packed: output of pack_params()."""
    w1, b1, w2, b2, w3, b3 = (packed[k] for k in ("w1", "b1", "w2", "b2", "w3", "b3"))
    in_dim, hid_p = w1.shape
    out_dim = w3.shape[1]
    compute_dtype = w1.dtype
    approx = jnp.dtype(compute_dtype) != jnp.dtype(jnp.float32)

    B = x.shape[0]
    assert x.shape[1] == in_dim, "input feature dim mismatch"
    out_dtype = x.dtype

    # ---- Batch tile: aim for >=4 grid steps (>=2 per TensorCore on v7x with
    # the "parallel" axis), cap at 1024 rows to amortize the ~0.35 us per-step
    # overhead, align to 16 rows (bf16 sublane packing). ----
    if tile_b is None:
        tile_b = min(1024, _round_up(pl.cdiv(B, 4), _ROW_ALIGN))
        tile_b = max(_ROW_ALIGN, tile_b)
    tile_b = max(_ROW_ALIGN, _round_up(int(tile_b), _ROW_ALIGN))
    B_p = _round_up(B, tile_b)
    grid = (B_p // tile_b,)

    # Only the batch may need padding; feature dims stay unpadded (full-dim
    # last axis blocks are legal), so no wrapper-side pad/cast pass over x in
    # the common case.
    x_p = x if B_p == B else jnp.pad(x, ((0, B_p - B), (0, 0)))

    itemsize = lambda a: a.size * a.dtype.itemsize
    cost = pl.CostEstimate(
        flops=2 * B_p * (in_dim * hid_p + hid_p * hid_p + hid_p * out_dim),
        transcendentals=B_p * (2 * hid_p + out_dim),
        bytes_accessed=(itemsize(x_p) + B_p * out_dim * jnp.dtype(out_dtype).itemsize
                        + sum(itemsize(a) for a in (w1, b1, w2, b2, w3, b3))),
    )

    # TODO(synk): for large hidden sizes (>= ~2.8K bf16) add an N/K grid axis
    # over w2/w3, set pipeline_mode=pl.Buffered(1) on the constant-index_map
    # weight specs, and raise vmem_limit_bytes via pltpu.CompilerParams; not
    # needed at these shapes (weights << 1 MiB, VMEM-resident).
    kernel = functools.partial(_generator_kernel, approx_recip=approx)
    out = pl.pallas_call(
        kernel,
        out_shape=jax.ShapeDtypeStruct((B_p, out_dim), out_dtype),
        grid_spec=pl.GridSpec(
            grid=grid,
            in_specs=[
                pl.BlockSpec((tile_b, in_dim), lambda i: (i, 0)),   # x tile (pipelined)
                pl.BlockSpec((in_dim, hid_p), lambda i: (0, 0)),    # w1 (VMEM-resident)
                pl.BlockSpec((1, hid_p), lambda i: (0, 0)),         # b1
                pl.BlockSpec((hid_p, hid_p), lambda i: (0, 0)),     # w2
                pl.BlockSpec((1, hid_p), lambda i: (0, 0)),         # b2
                pl.BlockSpec((hid_p, out_dim), lambda i: (0, 0)),   # w3
                pl.BlockSpec((1, out_dim), lambda i: (0, 0)),       # b3
            ],
            out_specs=pl.BlockSpec((tile_b, out_dim), lambda i: (i, 0)),
        ),
        compiler_params=pltpu.CompilerParams(
            dimension_semantics=("parallel",),
        ),
        cost_estimate=cost,
    )(x_p, w1, b1, w2, b2, w3, b3)

    return out if B_p == B else out[:B]


def init_params(key, input_size, hidden_size, output_size):
    """Deterministic init mimicking nn.Linear shapes: weight (out, in), bias (out,)."""
    k1, k2, k3, k4, k5, k6 = jax.random.split(key, 6)

    def lin_init(kw, kb, fan_in, fan_out):
        bound = 1.0 / jnp.sqrt(fan_in)
        w = jax.random.uniform(kw, (fan_out, fan_in), jnp.float32, -bound, bound)
        b = jax.random.uniform(kb, (fan_out,), jnp.float32, -bound, bound)
        return w, b

    w1, b1 = lin_init(k1, k2, input_size, hidden_size)
    w2, b2 = lin_init(k3, k4, hidden_size, hidden_size)
    w3, b3 = lin_init(k5, k6, hidden_size, output_size)
    return {"w1": w1, "b1": b1, "w2": w2, "b2": b2, "w3": w3, "b3": b3}


def _reference_forward(x, p):
    """Pure-JAX reference for correctness checking."""
    h1 = jax.nn.elu(x @ p["w1"].T + p["b1"])
    h2 = jax.nn.sigmoid(h1 @ p["w2"].T + p["b2"])
    return jax.nn.sigmoid(h2 @ p["w3"].T + p["b3"])


if __name__ == "__main__":
    # Small shapes consistent with the module: input=16, hidden=32, output=16.
    # batch=256 -> default tile_b=64, grid=(4,): DMA/compute pipelining and
    # >=2 steps per TensorCore when the parallel axis is sharded on v7x.
    batch, input_size, hidden_size, output_size = 256, 16, 32, 16

    key = jax.random.PRNGKey(0)
    kx, kp = jax.random.split(key)
    x = jax.random.normal(kx, (batch, input_size), dtype=jnp.float32)
    params = init_params(kp, input_size, hidden_size, output_size)

    ref = _reference_forward(x, params)

    # Fast path: bf16 operands on the MXU, f32 accumulation, approx reciprocal.
    packed_bf16 = pack_params(params, compute_dtype=jnp.bfloat16)
    out_bf16 = jax.block_until_ready(generator_forward(x, packed_bf16))
    assert out_bf16.shape == (batch, output_size)
    assert jnp.allclose(out_bf16, ref, atol=2e-2, rtol=2e-2), "bf16 path mismatch"

    # Exact path: f32 operands + exact reciprocal, tight tolerance vs. reference.
    packed_f32 = pack_params(params, compute_dtype=jnp.float32)
    out_f32 = jax.block_until_ready(generator_forward(x, packed_f32))
    assert out_f32.shape == (batch, output_size)
    assert jnp.allclose(out_f32, ref, atol=1e-4, rtol=1e-4), "f32 path mismatch"

    print("KERNEL_OK")
</pallas_src>

<mosaic_0001>
module attributes {stable_mosaic.version = 11 : i64} {
  func.func @_generator_kernel(%arg0: i32, %arg1: memref<64x16xf32, #tpu.memory_space<vmem>>, %arg2: memref<16x128xbf16, #tpu.memory_space<vmem>>, %arg3: memref<1x128xf32, #tpu.memory_space<vmem>>, %arg4: memref<128x128xbf16, #tpu.memory_space<vmem>>, %arg5: memref<1x128xf32, #tpu.memory_space<vmem>>, %arg6: memref<128x16xbf16, #tpu.memory_space<vmem>>, %arg7: memref<1x16xf32, #tpu.memory_space<vmem>>, %arg8: memref<64x16xf32, #tpu.memory_space<vmem>>) attributes {dimension_semantics = [#tpu.dimension_semantics<parallel>], iteration_bounds = array<i64: 4>, scalar_prefetch = 0 : i64, scratch_operands = 0 : i64, tpu.core_type = #tpu.core_type<tc>, window_params = [{transform_indices = @transform_0, window_bounds = array<i64: 64, 16>}, {pipeline_mode = #tpu.pipeline_mode<synchronous>, transform_indices = @transform_1, window_bounds = array<i64: 16, 128>}, {pipeline_mode = #tpu.pipeline_mode<synchronous>, transform_indices = @transform_2, window_bounds = array<i64: 1, 128>}, {pipeline_mode = #tpu.pipeline_mode<synchronous>, transform_indices = @transform_3, window_bounds = array<i64: 128, 128>}, {pipeline_mode = #tpu.pipeline_mode<synchronous>, transform_indices = @transform_4, window_bounds = array<i64: 1, 128>}, {pipeline_mode = #tpu.pipeline_mode<synchronous>, transform_indices = @transform_5, window_bounds = array<i64: 128, 16>}, {pipeline_mode = #tpu.pipeline_mode<synchronous>, transform_indices = @transform_6, window_bounds = array<i64: 1, 16>}, {transform_indices = @transform_7, window_bounds = array<i64: 64, 16>}]} {
    %c0 = arith.constant 0 : index
    %c0_0 = arith.constant 0 : index
    %0 = vector.load %arg1[%c0, %c0_0] : memref<64x16xf32, #tpu.memory_space<vmem>>, vector<64x16xf32>
    %1 = arith.truncf %0 : vector<64x16xf32> to vector<64x16xbf16>
    %c0_1 = arith.constant 0 : index
    %c0_2 = arith.constant 0 : index
    %2 = vector.load %arg2[%c0_1, %c0_2] : memref<16x128xbf16, #tpu.memory_space<vmem>>, vector<16x128xbf16>
    %cst = arith.constant dense<0.000000e+00> : vector<64x128xf32>
    %3 = tpu.matmul %1, %2, %cst {dimension_numbers = #tpu.dot_dimension_numbers<[1], [0], [0], [1], [0, 0, 1, 1], [], []>} : vector<64x16xbf16>, vector<16x128xbf16>, vector<64x128xf32> -> vector<64x128xf32>
    %c0_3 = arith.constant 0 : index
    %c0_4 = arith.constant 0 : index
    %4 = vector.load %arg3[%c0_3, %c0_4] : memref<1x128xf32, #tpu.memory_space<vmem>>, vector<1x128xf32>
    %5 = vector.broadcast %4 : vector<1x128xf32> to vector<64x128xf32>
    %6 = arith.addf %3, %5 : vector<64x128xf32>
    %cst_5 = arith.constant 0.000000e+00 : f32
    %7 = vector.broadcast %cst_5 : f32 to vector<64x128xf32>
    %8 = arith.cmpf ogt, %6, %7 : vector<64x128xf32>
    %9 = math.exp %6 : vector<64x128xf32>
    %cst_6 = arith.constant 1.000000e+00 : f32
    %10 = vector.broadcast %cst_6 : f32 to vector<64x128xf32>
    %11 = arith.subf %9, %10 : vector<64x128xf32>
    %12 = arith.select %8, %6, %11 : vector<64x128xi1>, vector<64x128xf32>
    %13 = arith.truncf %12 : vector<64x128xf32> to vector<64x128xbf16>
    %c0_7 = arith.constant 0 : index
    %c0_8 = arith.constant 0 : index
    %14 = vector.load %arg4[%c0_7, %c0_8] : memref<128x128xbf16, #tpu.memory_space<vmem>>, vector<128x128xbf16>
    %cst_9 = arith.constant dense<0.000000e+00> : vector<64x128xf32>
    %15 = tpu.matmul %13, %14, %cst_9 {dimension_numbers = #tpu.dot_dimension_numbers<[1], [0], [0], [1], [0, 0, 1, 1], [], []>} : vector<64x128xbf16>, vector<128x128xbf16>, vector<64x128xf32> -> vector<64x128xf32>
    %c0_10 = arith.constant 0 : index
    %c0_11 = arith.constant 0 : index
    %16 = vector.load %arg5[%c0_10, %c0_11] : memref<1x128xf32, #tpu.memory_space<vmem>>, vector<1x128xf32>
    %17 = vector.broadcast %16 : vector<1x128xf32> to vector<64x128xf32>
    %18 = arith.addf %15, %17 : vector<64x128xf32>
    %cst_12 = arith.constant 0.000000e+00 : f32
    %19 = vector.broadcast %cst_12 : f32 to vector<64x128xf32>
    %20 = arith.subf %19, %18 : vector<64x128xf32>
    %21 = math.exp %20 : vector<64x128xf32>
    %cst_13 = arith.constant 1.000000e+00 : f32
    %22 = vector.broadcast %cst_13 : f32 to vector<64x128xf32>
    %23 = arith.addf %22, %21 : vector<64x128xf32>
    %24 = tpu.reciprocal %23 {approx = true} : vector<64x128xf32> -> vector<64x128xf32>
    %25 = arith.truncf %24 : vector<64x128xf32> to vector<64x128xbf16>
    %c0_14 = arith.constant 0 : index
    %c0_15 = arith.constant 0 : index
    %26 = vector.load %arg6[%c0_14, %c0_15] : memref<128x16xbf16, #tpu.memory_space<vmem>>, vector<128x16xbf16>
    %cst_16 = arith.constant dense<0.000000e+00> : vector<64x16xf32>
    %27 = tpu.matmul %25, %26, %cst_16 {dimension_numbers = #tpu.dot_dimension_numbers<[1], [0], [0], [1], [0, 0, 1, 1], [], []>} : vector<64x128xbf16>, vector<128x16xbf16>, vector<64x16xf32> -> vector<64x16xf32>
    %c0_17 = arith.constant 0 : index
    %c0_18 = arith.constant 0 : index
    %28 = vector.load %arg7[%c0_17, %c0_18] : memref<1x16xf32, #tpu.memory_space<vmem>>, vector<1x16xf32>
    %29 = vector.broadcast %28 : vector<1x16xf32> to vector<64x16xf32>
    %30 = arith.addf %27, %29 : vector<64x16xf32>
    %cst_19 = arith.constant 0.000000e+00 : f32
    %31 = vector.broadcast %cst_19 : f32 to vector<64x16xf32>
    %32 = arith.subf %31, %30 : vector<64x16xf32>
    %33 = math.exp %32 : vector<64x16xf32>
    %cst_20 = arith.constant 1.000000e+00 : f32
    %34 = vector.broadcast %cst_20 : f32 to vector<64x16xf32>
    %35 = arith.addf %34, %33 : vector<64x16xf32>
    %36 = tpu.reciprocal %35 {approx = true} : vector<64x16xf32> -> vector<64x16xf32>
    %c0_21 = arith.constant 0 : index
    %c0_22 = arith.constant 0 : index
    %37 = vector.load %arg8[%c0_21, %c0_22] : memref<64x16xf32, #tpu.memory_space<vmem>>, vector<64x16xf32>
    tpu.vector_store %arg8[%c0_21, %c0_22], %36 {strides = array<i32>} : memref<64x16xf32, #tpu.memory_space<vmem>>, vector<64x16xf32>,
    return
  }
  func.func @transform_0(%arg0: i32) -> (i32, i32) {
    %c0_i32 = arith.constant 0 : i32
    %c0_i32_0 = arith.constant 0 : i32
    return %arg0, %c0_i32 : i32, i32
  }
  func.func @transform_1(%arg0: i32) -> (i32, i32) {
    %c0_i32 = arith.constant 0 : i32
    %c0_i32_0 = arith.constant 0 : i32
    %c0_i32_1 = arith.constant 0 : i32
    return %c0_i32, %c0_i32_0 : i32, i32
  }
  func.func @transform_2(%arg0: i32) -> (i32, i32) {
    %c0_i32 = arith.constant 0 : i32
    %c0_i32_0 = arith.constant 0 : i32
    %c0_i32_1 = arith.constant 0 : i32
    return %c0_i32, %c0_i32_0 : i32, i32
  }
  func.func @transform_3(%arg0: i32) -> (i32, i32) {
    %c0_i32 = arith.constant 0 : i32
    %c0_i32_0 = arith.constant 0 : i32
    %c0_i32_1 = arith.constant 0 : i32
    return %c0_i32, %c0_i32_0 : i32, i32
  }
  func.func @transform_4(%arg0: i32) -> (i32, i32) {
    %c0_i32 = arith.constant 0 : i32
    %c0_i32_0 = arith.constant 0 : i32
    %c0_i32_1 = arith.constant 0 : i32
    return %c0_i32, %c0_i32_0 : i32, i32
  }
  func.func @transform_5(%arg0: i32) -> (i32, i32) {
    %c0_i32 = arith.constant 0 : i32
    %c0_i32_0 = arith.constant 0 : i32
    %c0_i32_1 = arith.constant 0 : i32
    return %c0_i32, %c0_i32_0 : i32, i32
  }
  func.func @transform_6(%arg0: i32) -> (i32, i32) {
    %c0_i32 = arith.constant 0 : i32
    %c0_i32_0 = arith.constant 0 : i32
    %c0_i32_1 = arith.constant 0 : i32
    return %c0_i32, %c0_i32_0 : i32, i32
  }
  func.func @transform_7(%arg0: i32) -> (i32, i32) {
    %c0_i32 = arith.constant 0 : i32
    %c0_i32_0 = arith.constant 0 : i32
    return %arg0, %c0_i32 : i32, i32
  }
}

</mosaic_0001>

<llo_original>
// kernel: tpu_custom_call.1
$region0: #{tpu_custom_call.1}
  #allocation0 [shape = 'u32[]', space=smem, size = 0x4, offset = 0x4, fixed_abs, tag = 'smem constant byte address 0x4 - core index']
  #allocation1 [shape = 'u32[144,128]{1,0:T(1,128)}', space=vmem, size = 0x12000, scoped, tag = 'internal scratch']
  %s0 = inlined_call_operand.vmem [shape: f32[256,16], index: 0, kind: input, shape index: {}]
  %s1 = inlined_call_operand.vmem [shape: bf16[16,128], index: 1, kind: input, shape index: {}]
  %s2 = inlined_call_operand.vmem [shape: f32[1,128], index: 2, kind: input, shape index: {}]
  %s3 = inlined_call_operand.vmem [shape: bf16[128,128], index: 3, kind: input, shape index: {}]
  %s4 = inlined_call_operand.vmem [shape: f32[1,128], index: 4, kind: input, shape index: {}]
  %s5 = inlined_call_operand.vmem [shape: bf16[128,16], index: 5, kind: input, shape index: {}]
  %s6 = inlined_call_operand.vmem [shape: f32[1,16], index: 6, kind: input, shape index: {}]
  %s7 = inlined_call_operand.vmem [shape: f32[256,16], index: 7, kind: output, shape index: {}]
  %s8 = sld [smem:[#allocation0]]
  $region61: #{tpu_custom_call.1} parent=0
    _
  %s10 = ssub.s32 1, %s8
  %s11 = scalar_select 0, %s10, %s8
  loop: start=0, step=1, limit=6
  $region2: #{tpu_custom_call.1} parent=0 // loop_pre_header
    _
  $region3: #{tpu_custom_call.1} parent=0 // loop_header
    %s13 = sphi 0, %s17
    %p14 = scmp.ge.s32.totalorder %s13, 6
    %s23 = sphi 0, %s25
    %s26 = sphi 0, %s23
    %s27 = sphi 0, %s26
    %s43 = sphi 0, %s27
    %s47 = sphi 0, %s47
    %s49 = sphi 0, %s47
    %s50 = sphi 0, %s49
    %s64 = sphi 0, %s50
    %s68 = sphi 0, %s68
    %s70 = sphi 0, %s68
    %s71 = sphi 0, %s70
    %s85 = sphi 0, %s71
    %s89 = sphi 0, %s89
    %s91 = sphi 0, %s89
    %s92 = sphi 0, %s91
    %s106 = sphi 0, %s92
    %s110 = sphi 0, %s110
    %s112 = sphi 0, %s110
    %s113 = sphi 0, %s112
    %s127 = sphi 0, %s113
    %s131 = sphi 0, %s131
    %s133 = sphi 0, %s131
    %s134 = sphi 0, %s133
    %s148 = sphi 0, %s134
    %s152 = sphi 0, %s152
    %s154 = sphi 0, %s152
    %s155 = sphi 0, %s154
    %s169 = sphi 0, %s155
    %s175 = sphi 0, %s177
    %s178 = sphi 0, %s175
    %s179 = sphi 0, %s178
    %s195 = sphi 0, %s179
  $region4: #{tpu_custom_call.1} parent=0 // loop_header_branch
    %16 = sbr.rel (%p14) target = $region8
  $region5: #{tpu_custom_call.1} parent=0 // loop_body
    %s18 = ssub.s32 %s13, 1
    %s19 = ssub.s32 %s13, 2
    %s20 = sadd.s32 %s13, 1
    %s21 = ssub.s32 %s13, %s20
    %p22 = scmp.eq.s32.totalorder %s21, 0
    %s24 = sadd.s32 %s23, 1
    %s25 = scalar_select %p22, %s23, %s24
    %p28 = pneg %p22
    %p29 = scmp.eq.s32.totalorder %s13, 3
    %p30 = por %p28, %p29
    %p31 = scmp.ne.s32.totalorder %s23, %s26
    %p32 = scmp.eq.s32.totalorder %s13, 0
    %p33 = por %p31, %p32
    %p34 = scmp.ne.s32.totalorder %s23, %s26
    %p35 = scmp.eq.s32.totalorder %s18, 3
    %p36 = por %p34, %p35
    %p37 = scmp.ne.s32.totalorder %s26, %s27
    %p38 = scmp.eq.s32.totalorder %s18, 0
    %p39 = por %p37, %p38
    %p40 = scmp.ne.s32.totalorder %s26, %s27
    %p41 = scmp.eq.s32.totalorder %s19, 3
    %p42 = por %p40, %p41
    %p44 = scmp.ne.s32.totalorder %s27, %s43
    %p45 = scmp.eq.s32.totalorder %s19, 0
    %p46 = por %p44, %p45
    %s48 = sadd.s32 %s47, 1
    %p51 = scmp.eq.s32.totalorder %s13, 3
    %p52 = scmp.ne.s32.totalorder %s47, %s49
    %p53 = scmp.eq.s32.totalorder %s13, 0
    %p54 = por %p52, %p53
    %p55 = scmp.ne.s32.totalorder %s47, %s49
    %p56 = scmp.eq.s32.totalorder %s18, 3
    %p57 = por %p55, %p56
    %p58 = scmp.ne.s32.totalorder %s49, %s50
    %p59 = scmp.eq.s32.totalorder %s18, 0
    %p60 = por %p58, %p59
    %p61 = scmp.ne.s32.totalorder %s49, %s50
    %p62 = scmp.eq.s32.totalorder %s19, 3
    %p63 = por %p61, %p62
    %p65 = scmp.ne.s32.totalorder %s50, %s64
    %p66 = scmp.eq.s32.totalorder %s19, 0
    %p67 = por %p65, %p66
    %s69 = sadd.s32 %s68, 1
    %p72 = scmp.eq.s32.totalorder %s13, 3
    %p73 = scmp.ne.s32.totalorder %s68, %s70
    %p74 = scmp.eq.s32.totalorder %s13, 0
    %p75 = por %p73, %p74
    %p76 = scmp.ne.s32.totalorder %s68, %s70
    %p77 = scmp.eq.s32.totalorder %s18, 3
    %p78 = por %p76, %p77
    %p79 = scmp.ne.s32.totalorder %s70, %s71
    %p80 = scmp.eq.s32.totalorder %s18, 0
    %p81 = por %p79, %p80
    %p82 = scmp.ne.s32.totalorder %s70, %s71
    %p83 = scmp.eq.s32.totalorder %s19, 3
    %p84 = por %p82, %p83
    %p86 = scmp.ne.s32.totalorder %s71, %s85
    %p87 = scmp.eq.s32.totalorder %s19, 0
    %p88 = por %p86, %p87
    %s90 = sadd.s32 %s89, 1
    %p93 = scmp.eq.s32.totalorder %s13, 3
    %p94 = scmp.ne.s32.totalorder %s89, %s91
    %p95 = scmp.eq.s32.totalorder %s13, 0
    %p96 = por %p94, %p95
    %p97 = scmp.ne.s32.totalorder %s89, %s91
    %p98 = scmp.eq.s32.totalorder %s18, 3
    %p99 = por %p97, %p98
    %p100 = scmp.ne.s32.totalorder %s91, %s92
    %p101 = scmp.eq.s32.totalorder %s18, 0
    %p102 = por %p100, %p101
    %p103 = scmp.ne.s32.totalorder %s91, %s92
    %p104 = scmp.eq.s32.totalorder %s19, 3
    %p105 = por %p103, %p104
    %p107 = scmp.ne.s32.totalorder %s92, %s106
    %p108 = scmp.eq.s32.totalorder %s19, 0
    %p109 = por %p107, %p108
    %s111 = sadd.s32 %s110, 1
    %p114 = scmp.eq.s32.totalorder %s13, 3
    %p115 = scmp.ne.s32.totalorder %s110, %s112
    %p116 = scmp.eq.s32.totalorder %s13, 0
    %p117 = por %p115, %p116
    %p118 = scmp.ne.s32.totalorder %s110, %s112
    %p119 = scmp.eq.s32.totalorder %s18, 3
    %p120 = por %p118, %p119
    %p121 = scmp.ne.s32.totalorder %s112, %s113
    %p122 = scmp.eq.s32.totalorder %s18, 0
    %p123 = por %p121, %p122
    %p124 = scmp.ne.s32.totalorder %s112, %s113
    %p125 = scmp.eq.s32.totalorder %s19, 3
    %p126 = por %p124, %p125
    %p128 = scmp.ne.s32.totalorder %s113, %s127
    %p129 = scmp.eq.s32.totalorder %s19, 0
    %p130 = por %p128, %p129
    %s132 = sadd.s32 %s131, 1
    %p135 = scmp.eq.s32.totalorder %s13, 3
    %p136 = scmp.ne.s32.totalorder %s131, %s133
    %p137 = scmp.eq.s32.totalorder %s13, 0
    %p138 = por %p136, %p137
    %p139 = scmp.ne.s32.totalorder %s131, %s133
    %p140 = scmp.eq.s32.totalorder %s18, 3
    %p141 = por %p139, %p140
    %p142 = scmp.ne.s32.totalorder %s133, %s134
    %p143 = scmp.eq.s32.totalorder %s18, 0
    %p144 = por %p142, %p143
    %p145 = scmp.ne.s32.totalorder %s133, %s134
    %p146 = scmp.eq.s32.totalorder %s19, 3
    %p147 = por %p145, %p146
    %p149 = scmp.ne.s32.totalorder %s134, %s148
    %p150 = scmp.eq.s32.totalorder %s19, 0
    %p151 = por %p149, %p150
    %s153 = sadd.s32 %s152, 1
    %p156 = scmp.eq.s32.totalorder %s13, 3
    %p157 = scmp.ne.s32.totalorder %s152, %s154
    %p158 = scmp.eq.s32.totalorder %s13, 0
    %p159 = por %p157, %p158
    %p160 = scmp.ne.s32.totalorder %s152, %s154
    %p161 = scmp.eq.s32.totalorder %s18, 3
    %p162 = por %p160, %p161
    %p163 = scmp.ne.s32.totalorder %s154, %s155
    %p164 = scmp.eq.s32.totalorder %s18, 0
    %p165 = por %p163, %p164
    %p166 = scmp.ne.s32.totalorder %s154, %s155
    %p167 = scmp.eq.s32.totalorder %s19, 3
    %p168 = por %p166, %p167
    %p170 = scmp.ne.s32.totalorder %s155, %s169
    %p171 = scmp.eq.s32.totalorder %s19, 0
    %p172 = por %p170, %p171
    %s173 = ssub.s32 %s13, %s20
    %p174 = scmp.eq.s32.totalorder %s173, 0
    %s176 = sadd.s32 %s175, 1
    %s177 = scalar_select %p174, %s175, %s176
    %p180 = pneg %p174
    %p181 = scmp.eq.s32.totalorder %s13, 3
    %p182 = por %p180, %p181
    %p183 = scmp.ne.s32.totalorder %s175, %s178
    %p184 = scmp.eq.s32.totalorder %s13, 0
    %p185 = por %p183, %p184
    %p186 = scmp.ne.s32.totalorder %s175, %s178
    %p187 = scmp.eq.s32.totalorder %s18, 3
    %p188 = por %p186, %p187
    %p189 = scmp.ne.s32.totalorder %s178, %s179
    %p190 = scmp.eq.s32.totalorder %s18, 0
    %p191 = por %p189, %p190
    %p192 = scmp.ne.s32.totalorder %s178, %s179
    %p193 = scmp.eq.s32.totalorder %s19, 3
    %p194 = por %p192, %p193
    %p196 = scmp.ne.s32.totalorder %s179, %s195
    %p197 = scmp.eq.s32.totalorder %s19, 0
    %p198 = por %p196, %p197
    %p199 = scmp.le.s32.totalorder 1, %s13
    %p200 = scmp.lt.s32.totalorder %s13, 5
    %p201 = pnand %p199, %p200
    %p202 = pneg %p201
    // Predicated region
    $region9: #{tpu_custom_call.1} parent=5 // pred_check
      _
    $region10: #{tpu_custom_call.1} parent=5 // pred_check_branch
      %204 = sbr.rel (%p201) target = $region12
    $region11: #{tpu_custom_call.1} parent=5 // pred_region
      %s205 = ssub.s32 %s13, 1
      // Predicated region
      $region13: #{tpu_custom_call.1} parent=11 // pred_check
        %p206 = pneg %p60
      $region14: #{tpu_custom_call.1} parent=11 // pred_check_branch
        %208 = sbr.rel (%p206) target = $region16
      $region15: #{tpu_custom_call.1} parent=11 // pred_region
        _
      $region16: #{tpu_custom_call.1} parent=11 // pred_fallthru
        _
      // Predicated region
      $region17: #{tpu_custom_call.1} parent=11 // pred_check
        %p209 = pneg %p81
      $region18: #{tpu_custom_call.1} parent=11 // pred_check_branch
        %211 = sbr.rel (%p209) target = $region20
      $region19: #{tpu_custom_call.1} parent=11 // pred_region
        _
      $region20: #{tpu_custom_call.1} parent=11 // pred_fallthru
        _
      // Predicated region
      $region21: #{tpu_custom_call.1} parent=11 // pred_check
        %p212 = pneg %p102
      $region22: #{tpu_custom_call.1} parent=11 // pred_check_branch
        %214 = sbr.rel (%p212) target = $region24
      $region23: #{tpu_custom_call.1} parent=11 // pred_region
        _
      $region24: #{tpu_custom_call.1} parent=11 // pred_fallthru
        _
      // Predicated region
      $region25: #{tpu_custom_call.1} parent=11 // pred_check
        %p215 = pneg %p123
      $region26: #{tpu_custom_call.1} parent=11 // pred_check_branch
        %217 = sbr.rel (%p215) target = $region28
      $region27: #{tpu_custom_call.1} parent=11 // pred_region
        _
      $region28: #{tpu_custom_call.1} parent=11 // pred_fallthru
        _
      // Predicated region
      $region29: #{tpu_custom_call.1} parent=11 // pred_check
        %p218 = pneg %p144
      $region30: #{tpu_custom_call.1} parent=11 // pred_check_branch
        %220 = sbr.rel (%p218) target = $region32
      $region31: #{tpu_custom_call.1} parent=11 // pred_region
        _
      $region32: #{tpu_custom_call.1} parent=11 // pred_fallthru
        _
      // Predicated region
      $region33: #{tpu_custom_call.1} parent=11 // pred_check
        %p221 = pneg %p165
      $region34: #{tpu_custom_call.1} parent=11 // pred_check_branch
        %223 = sbr.rel (%p221) target = $region36
      $region35: #{tpu_custom_call.1} parent=11 // pred_region
        _
      $region36: #{tpu_custom_call.1} parent=11 // pred_fallthru
        _
    $region12: #{tpu_custom_call.1} parent=5 // pred_fallthru
      _
    %p224 = scmp.lt.s32.totalorder %s13, 4
    // Predicated region
    $region37: #{tpu_custom_call.1} parent=5 // pred_check
      %p225 = pneg %p224
    $region38: #{tpu_custom_call.1} parent=5 // pred_check_branch
      %227 = sbr.rel (%p225) target = $region40
    $region39: #{tpu_custom_call.1} parent=5 // pred_region
      // Predicated region
      $region41: #{tpu_custom_call.1} parent=39 // pred_check
        %p228 = pneg %p33
      $region42: #{tpu_custom_call.1} parent=39 // pred_check_branch
        %230 = sbr.rel (%p228) target = $region44
      $region43: #{tpu_custom_call.1} parent=39 // pred_region
        %s231 = smul.u32 8, %s13
        %p232 = scmp.lt.s32.totalorder %s231, 31
        %s233 = scalar_select %p232, %s231, 31
        %s234 = smul.addr %s233, 8
        %s235 = scalar_lea.vmem %s0, %s234
        %s236 = smul.u32 8, %s13
      $region44: #{tpu_custom_call.1} parent=39 // pred_fallthru
        _
    $region40: #{tpu_custom_call.1} parent=5 // pred_fallthru
      _
    %p237 = scmp.le.s32.totalorder 1, %s13
    %p238 = scmp.lt.s32.totalorder %s13, 5
    %p239 = pnand %p237, %p238
    %p240 = pneg %p239
    // Predicated region
    $region45: #{tpu_custom_call.1} parent=5 // pred_check
      _
    $region46: #{tpu_custom_call.1} parent=5 // pred_check_branch
      %242 = sbr.rel (%p239) target = $region48
    $region47: #{tpu_custom_call.1} parent=5 // pred_region
      %s243 = ssub.s32 %s13, 1
      %s244 = smul.u32 8, %s18
      %p245 = scmp.lt.s32.totalorder %s244, 31
      %s246 = scalar_select %p245, %s244, 31
      %s247 = smul.addr %s246, 8
      %s248 = scalar_lea.vmem %s0, %s247
      %p249 = pneg %p39
      %p250 = pneg %p36
      %p251 = pneg %p60
      %p252 = pneg %p57
      %p253 = pneg %p81
      %p254 = pneg %p78
      %p255 = pneg %p102
      %p256 = pneg %p99
      %p257 = pneg %p123
      %p258 = pneg %p120
      %p259 = pneg %p144
      %p260 = pneg %p141
      %p261 = pneg %p165
      %p262 = pneg %p162
      %p263 = pneg %p191
      %p264 = pneg %p188
      %s265 = smul.u32 8, %s18
      %p266 = scmp.lt.s32.totalorder %s265, 31
      %s267 = scalar_select %p266, %s265, 31
      %s268 = smul.addr %s267, 8
      %s269 = scalar_lea.vmem %s7, %s268
      %s270 = smul.u32 8, %s18
      %p271 = scmp.lt.s32.totalorder %s270, 31
      %s272 = scalar_select %p271, %s270, 31
      %s273 = smul.addr %s272, 8
      %s274 = scalar_lea.vmem %s0, %s273
      %s275 = smul.u32 8, %s18
      %s276 = smul.u32 8, %s18
      %p277 = scmp.lt.s32.totalorder %s276, 31
      %s278 = scalar_select %p277, %s276, 31
      %s279 = smul.addr %s278, 8
      %s280 = scalar_lea.vmem %s7, %s279
      %s281 = smul.u32 8, %s18
      %v283 = vld [vmem:[%s274] sm:$0xff]
      %v284 = vld [vmem:[%s274 + $0x8] sm:$0xff]
      %v285 = vld [vmem:[%s274 + $0x10] sm:$0xff]
      %v286 = vld [vmem:[%s274 + $0x18] sm:$0xff]
      %v287 = vld [vmem:[%s274 + $0x20] sm:$0xff]
      %v288 = vld [vmem:[%s274 + $0x28] sm:$0xff]
      %v289 = vld [vmem:[%s274 + $0x30] sm:$0xff]
      %v290 = vld [vmem:[%s274 + $0x38] sm:$0xff]
      %v291 = vpack.c.bf16 %v284, %v283
      %v292 = vpack.c.bf16 %v286, %v285
      %v293 = vpack.c.bf16 %v288, %v287
      %v294 = vpack.c.bf16 %v290, %v289
      %v295 = vld [vmem:[%s1] sm:$0xf]
      %v296 = vld [vmem:[%s1 + $0x4] sm:$0xf]
      %v297 = vld [vmem:[%s2] sm:$0x1]
      %v299 = vlaneseq
      %v300 = vshrl.u32 %v299, 7
      %v301 = vsub.s32 0, %v300
      %v302 = vrot.slane %v297, %v301
      %v306 = vunpack.c.l.b16 %v295
      %v307 = vunpack.c.l.b16 %v296
      %v308 = vpack.c.b16 %v307, %v306
      %vm310 = vcmask 130048
      %v312 = vsel %vm310, %v291, 0
      %v315 = vsel %vm310, %v292, 0
      %v318 = vsel %vm310, %v293, 0
      %v321 = vsel %vm310, %v294, 0
      %323 = vmatprep.subr.bf16.mxu0 0
      %324 = vmatpush1.bf16.msra.mxu0 0
      %325 = vmatprep.subr.bf16.mxu0 0
      %326 = vmatpush1.bf16.msra.mxu0 0
      %327 = vmatprep.subr.bf16.mxu0 0
      %328 = vmatpush1.bf16.msra.mxu0 0
      %329 = vmatprep.subr.bf16.mxu0 0
      %330 = vmatpush1.bf16.msra.mxu0 0
      %331 = vmatprep.subr.bf16.mxu0 0
      %332 = vmatpush1.bf16.msra.mxu0 0
      %333 = vmatprep.subr.bf16.mxu0 0
      %334 = vmatpush1.bf16.msra.mxu0 0
      %335 = vmatprep.subr.bf16.mxu0 0
      %336 = vmatpush1.bf16.msra.mxu0 0
      %337 = vmatprep.subr.bf16.mxu0 0
      %338 = vmatpush1.bf16.msra.mxu0 %v308
      %339 = vmatprep.subr.bf16.mxu0 0
      %340 = vmatpush2.bf16.msra.mxu0 0
      %341 = vmatprep.subr.bf16.mxu0 0
      %342 = vmatpush2.bf16.msra.mxu0 0
      %343 = vmatprep.subr.bf16.mxu0 0
      %344 = vmatpush2.bf16.msra.mxu0 0
      %345 = vmatprep.subr.bf16.mxu0 0
      %346 = vmatpush2.bf16.msra.mxu0 0
      %347 = vmatprep.subr.bf16.mxu0 0
      %348 = vmatpush2.bf16.msra.mxu0 0
      %349 = vmatprep.subr.bf16.mxu0 0
      %350 = vmatpush2.bf16.msra.mxu0 0
      %351 = vmatprep.subr.bf16.mxu0 0
      %352 = vmatpush2.bf16.msra.mxu0 0
      %353 = vmatprep.subr.bf16.mxu0 0
      %354 = vmatpush2.bf16.msra.mxu0 0
      %355 = vmatprep.mubr.bf16.mxu0 0
      %356 = vmatmul.mubr.bf16.gmra.mxu0 %v312
      %v357 = vpop.f32.mrf.mxu0
      %v358 = vadd.f32 %v302, %v357
      %v359 = vpop.f32.mrf.mxu0
      %v360 = vpop.f32.mrf.mxu0
      %v361 = vadd.f32 %v302, %v360
      %v362 = vpop.f32.mrf.mxu0
      %363 = vmatprep.mubr.bf16.mxu0 0
      %364 = vmatmul.mubr.bf16.gmra.mxu0 %v315
      %v365 = vpop.f32.mrf.mxu0
      %v366 = vadd.f32 %v302, %v365
      %v367 = vpop.f32.mrf.mxu0
      %v368 = vpop.f32.mrf.mxu0
      %v369 = vadd.f32 %v302, %v368
      %v370 = vpop.f32.mrf.mxu0
      %371 = vmatprep.mubr.bf16.mxu0 0
      %372 = vmatmul.mubr.bf16.gmra.mxu0 %v318
      %v373 = vpop.f32.mrf.mxu0
      %v374 = vadd.f32 %v302, %v373
      %v375 = vpop.f32.mrf.mxu0
      %v376 = vpop.f32.mrf.mxu0
      %v377 = vadd.f32 %v302, %v376
      %v378 = vpop.f32.mrf.mxu0
      %379 = vmatprep.mubr.bf16.mxu0 0
      %380 = vmatmul.mubr.bf16.gmra.mxu0 %v321
      %v381 = vpop.f32.mrf.mxu0
      %v382 = vadd.f32 %v302, %v381
      %v383 = vpop.f32.mrf.mxu0
      %v384 = vpop.f32.mrf.mxu0
      %v385 = vadd.f32 %v302, %v384
      %v386 = vpop.f32.mrf.mxu0
      %387 = vdwg.mxu0
      %vm388 = vcmp.gt.f32.partialorder %v358, 0.0
      %vm389 = vcmp.gt.f32.partialorder %v361, 0.0
      %vm390 = vcmp.gt.f32.partialorder %v366, 0.0
      %vm391 = vcmp.gt.f32.partialorder %v369, 0.0
      %vm392 = vcmp.gt.f32.partialorder %v374, 0.0
      %vm393 = vcmp.gt.f32.partialorder %v377, 0.0
      %vm394 = vcmp.gt.f32.partialorder %v382, 0.0
      %vm395 = vcmp.gt.f32.partialorder %v385, 0.0
      %v396 = vmul.f32 %v358, 1.442695
      %v397 = vpow.pop %v396
      %v398 = vmul.f32 %v361, 1.442695
      %v399 = vpow.pop %v398
      %v400 = vmul.f32 %v366, 1.442695
      %v401 = vpow.pop %v400
      %v402 = vmul.f32 %v369, 1.442695
      %v403 = vpow.pop %v402
      %v404 = vmul.f32 %v374, 1.442695
      %v405 = vpow.pop %v404
      %v406 = vmul.f32 %v377, 1.442695
      %v407 = vpow.pop %v406
      %v408 = vmul.f32 %v382, 1.442695
      %v409 = vpow.pop %v408
      %v410 = vmul.f32 %v385, 1.442695
      %v411 = vpow.pop %v410
      %v412 = vsub.f32 %v397, 1.0
      %v413 = vsub.f32 %v399, 1.0
      %v414 = vsub.f32 %v401, 1.0
      %v415 = vsub.f32 %v403, 1.0
      %v416 = vsub.f32 %v405, 1.0
      %v417 = vsub.f32 %v407, 1.0
      %v418 = vsub.f32 %v409, 1.0
      %v419 = vsub.f32 %v411, 1.0
      %v420 = vsel %vm388, %v358, %v412
      %v421 = vsel %vm389, %v361, %v413
      %v422 = vsel %vm390, %v366, %v414
      %v423 = vsel %vm391, %v369, %v415
      %v424 = vsel %vm392, %v374, %v416
      %v425 = vsel %vm393, %v377, %v417
      %v426 = vsel %vm394, %v382, %v418
      %v427 = vsel %vm395, %v385, %v419
      %v428 = vpack.c.bf16 %v421, %v420
      %v429 = vpack.c.bf16 %v423, %v422
      %v430 = vpack.c.bf16 %v425, %v424
      %v431 = vpack.c.bf16 %v427, %v426
      %v432 = vld [vmem:[%s3] sm:$0xf]
      %v433 = vld [vmem:[%s3 + $0x4] sm:$0xf]
      %v434 = vld [vmem:[%s3 + $0x8] sm:$0xf]
      %v435 = vld [vmem:[%s3 + $0xc] sm:$0xf]
      %v436 = vld [vmem:[%s3 + $0x10] sm:$0xf]
      %v437 = vld [vmem:[%s3 + $0x14] sm:$0xf]
      %v438 = vld [vmem:[%s3 + $0x18] sm:$0xf]
      %v439 = vld [vmem:[%s3 + $0x1c] sm:$0xf]
      %v440 = vld [vmem:[%s3 + $0x20] sm:$0xf]
      %v441 = vld [vmem:[%s3 + $0x24] sm:$0xf]
      %v442 = vld [vmem:[%s3 + $0x28] sm:$0xf]
      %v443 = vld [vmem:[%s3 + $0x2c] sm:$0xf]
      %v444 = vld [vmem:[%s3 + $0x30] sm:$0xf]
      %v445 = vld [vmem:[%s3 + $0x34] sm:$0xf]
      %v446 = vld [vmem:[%s3 + $0x38] sm:$0xf]
      %v447 = vld [vmem:[%s3 + $0x3c] sm:$0xf]
      %v448 = vld [vmem:[%s4] sm:$0x1]
      %v450 = vlaneseq
      %v451 = vshrl.u32 %v450, 7
      %v452 = vsub.s32 0, %v451
      %v453 = vrot.slane %v448, %v452
      %v471 = vunpack.c.l.b16 %v432
      %v472 = vunpack.c.l.b16 %v433
      %v473 = vunpack.c.l.b16 %v434
      %v474 = vunpack.c.l.b16 %v435
      %v475 = vunpack.c.l.b16 %v436
      %v476 = vunpack.c.l.b16 %v437
      %v477 = vunpack.c.l.b16 %v438
      %v478 = vunpack.c.l.b16 %v439
      %v479 = vunpack.c.l.b16 %v440
      %v480 = vunpack.c.l.b16 %v441
      %v481 = vunpack.c.l.b16 %v442
      %v482 = vunpack.c.l.b16 %v443
      %v483 = vunpack.c.l.b16 %v444
      %v484 = vunpack.c.l.b16 %v445
      %v485 = vunpack.c.l.b16 %v446
      %v486 = vunpack.c.l.b16 %v447
      %v487 = vpack.c.b16 %v472, %v471
      %v488 = vpack.c.b16 %v474, %v473
      %v489 = vpack.c.b16 %v476, %v475
      %v490 = vpack.c.b16 %v478, %v477
      %v491 = vpack.c.b16 %v480, %v479
      %v492 = vpack.c.b16 %v482, %v481
      %v493 = vpack.c.b16 %v484, %v483
      %v494 = vpack.c.b16 %v486, %v485
      %503 = vmatprep.subr.bf16.mxu0 0
      %504 = vmatpush1.bf16.msra.mxu0 %v494
      %505 = vmatprep.subr.bf16.mxu0 0
      %506 = vmatpush1.bf16.msra.mxu0 %v493
      %507 = vmatprep.subr.bf16.mxu0 0
      %508 = vmatpush1.bf16.msra.mxu0 %v492
      %509 = vmatprep.subr.bf16.mxu0 0
      %510 = vmatpush1.bf16.msra.mxu0 %v491
      %511 = vmatprep.subr.bf16.mxu0 0
      %512 = vmatpush1.bf16.msra.mxu0 %v490
      %513 = vmatprep.subr.bf16.mxu0 0
      %514 = vmatpush1.bf16.msra.mxu0 %v489
      %515 = vmatprep.subr.bf16.mxu0 0
      %516 = vmatpush1.bf16.msra.mxu0 %v488
      %517 = vmatprep.subr.bf16.mxu0 0
      %518 = vmatpush1.bf16.msra.mxu0 %v487
      %519 = vmatprep.subr.bf16.mxu0 0
      %520 = vmatpush2.bf16.msra.mxu0 0
      %521 = vmatprep.subr.bf16.mxu0 0
      %522 = vmatpush2.bf16.msra.mxu0 0
      %523 = vmatprep.subr.bf16.mxu0 0
      %524 = vmatpush2.bf16.msra.mxu0 0
      %525 = vmatprep.subr.bf16.mxu0 0
      %526 = vmatpush2.bf16.msra.mxu0 0
      %527 = vmatprep.subr.bf16.mxu0 0
      %528 = vmatpush2.bf16.msra.mxu0 0
      %529 = vmatprep.subr.bf16.mxu0 0
      %530 = vmatpush2.bf16.msra.mxu0 0
      %531 = vmatprep.subr.bf16.mxu0 0
      %532 = vmatpush2.bf16.msra.mxu0 0
      %533 = vmatprep.subr.bf16.mxu0 0
      %534 = vmatpush2.bf16.msra.mxu0 0
      %535 = vmatprep.mubr.bf16.mxu0 0
      %536 = vmatmul.mubr.bf16.gmra.mxu0 %v428
      %v537 = vpop.f32.mrf.mxu0
      %v538 = vadd.f32 %v453, %v537
      %v539 = vpop.f32.mrf.mxu0
      %v540 = vpop.f32.mrf.mxu0
      %v541 = vadd.f32 %v453, %v540
      %v542 = vpop.f32.mrf.mxu0
      %543 = vmatprep.mubr.bf16.mxu0 0
      %544 = vmatmul.mubr.bf16.gmra.mxu0 %v429
      %v545 = vpop.f32.mrf.mxu0
      %v546 = vadd.f32 %v453, %v545
      %v547 = vpop.f32.mrf.mxu0
      %v548 = vpop.f32.mrf.mxu0
      %v549 = vadd.f32 %v453, %v548
      %v550 = vpop.f32.mrf.mxu0
      %551 = vmatprep.mubr.bf16.mxu0 0
      %552 = vmatmul.mubr.bf16.gmra.mxu0 %v430
      %v553 = vpop.f32.mrf.mxu0
      %v554 = vadd.f32 %v453, %v553
      %v555 = vpop.f32.mrf.mxu0
      %v556 = vpop.f32.mrf.mxu0
      %v557 = vadd.f32 %v453, %v556
      %v558 = vpop.f32.mrf.mxu0
      %559 = vmatprep.mubr.bf16.mxu0 0
      %560 = vmatmul.mubr.bf16.gmra.mxu0 %v431
      %v561 = vpop.f32.mrf.mxu0
      %v562 = vadd.f32 %v453, %v561
      %v563 = vpop.f32.mrf.mxu0
      %v564 = vpop.f32.mrf.mxu0
      %v565 = vadd.f32 %v453, %v564
      %v566 = vpop.f32.mrf.mxu0
      %567 = vdwg.mxu0
      %v568 = vsub.f32 0.0, %v538
      %v569 = vsub.f32 0.0, %v541
      %v570 = vsub.f32 0.0, %v546
      %v571 = vsub.f32 0.0, %v549
      %v572 = vsub.f32 0.0, %v554
      %v573 = vsub.f32 0.0, %v557
      %v574 = vsub.f32 0.0, %v562
      %v575 = vsub.f32 0.0, %v565
      %v576 = vmul.f32 %v568, 1.442695
      %v577 = vpow.pop %v576
      %v578 = vmul.f32 %v569, 1.442695
      %v579 = vpow.pop %v578
      %v580 = vmul.f32 %v570, 1.442695
      %v581 = vpow.pop %v580
      %v582 = vmul.f32 %v571, 1.442695
      %v583 = vpow.pop %v582
      %v584 = vmul.f32 %v572, 1.442695
      %v585 = vpow.pop %v584
      %v586 = vmul.f32 %v573, 1.442695
      %v587 = vpow.pop %v586
      %v588 = vmul.f32 %v574, 1.442695
      %v589 = vpow.pop %v588
      %v590 = vmul.f32 %v575, 1.442695
      %v591 = vpow.pop %v590
      %v592 = vadd.f32 %v577, 1.0
      %v593 = vadd.f32 %v579, 1.0
      %v594 = vadd.f32 %v581, 1.0
      %v595 = vadd.f32 %v583, 1.0
      %v596 = vadd.f32 %v585, 1.0
      %v597 = vadd.f32 %v587, 1.0
      %v598 = vadd.f32 %v589, 1.0
      %v599 = vadd.f32 %v591, 1.0
      %v600 = vrcp.pop %v592
      %v601 = vrcp.pop %v593
      %v602 = vrcp.pop %v594
      %v603 = vrcp.pop %v595
      %v604 = vrcp.pop %v596
      %v605 = vrcp.pop %v597
      %v606 = vrcp.pop %v598
      %v607 = vrcp.pop %v599
      %v608 = vpack.c.bf16 %v601, %v600
      %v609 = vpack.c.bf16 %v603, %v602
      %v610 = vpack.c.bf16 %v605, %v604
      %v611 = vpack.c.bf16 %v607, %v606
      %v612 = vld [vmem:[%s5] sm:$0xf]
      %v613 = vld [vmem:[%s5 + $0x4] sm:$0xf]
      %v614 = vld [vmem:[%s5 + $0x8] sm:$0xf]
      %v615 = vld [vmem:[%s5 + $0xc] sm:$0xf]
      %v616 = vld [vmem:[%s5 + $0x10] sm:$0xf]
      %v617 = vld [vmem:[%s5 + $0x14] sm:$0xf]
      %v618 = vld [vmem:[%s5 + $0x18] sm:$0xf]
      %v619 = vld [vmem:[%s5 + $0x1c] sm:$0xf]
      %v620 = vld [vmem:[%s5 + $0x20] sm:$0xf]
      %v621 = vld [vmem:[%s5 + $0x24] sm:$0xf]
      %v622 = vld [vmem:[%s5 + $0x28] sm:$0xf]
      %v623 = vld [vmem:[%s5 + $0x2c] sm:$0xf]
      %v624 = vld [vmem:[%s5 + $0x30] sm:$0xf]
      %v625 = vld [vmem:[%s5 + $0x34] sm:$0xf]
      %v626 = vld [vmem:[%s5 + $0x38] sm:$0xf]
      %v627 = vld [vmem:[%s5 + $0x3c] sm:$0xf]
      %v628 = vld [vmem:[%s6] sm:$0x1]
      %v630 = vlaneseq
      %v631 = vshrl.u32 %v630, 7
      %v632 = vsub.s32 0, %v631
      %v633 = vrot.slane %v628, %v632
      %v651 = vunpack.c.l.b16 %v612
      %v652 = vunpack.c.l.b16 %v613
      %v653 = vunpack.c.l.b16 %v614
      %v654 = vunpack.c.l.b16 %v615
      %v655 = vunpack.c.l.b16 %v616
      %v656 = vunpack.c.l.b16 %v617
      %v657 = vunpack.c.l.b16 %v618
      %v658 = vunpack.c.l.b16 %v619
      %v659 = vunpack.c.l.b16 %v620
      %v660 = vunpack.c.l.b16 %v621
      %v661 = vunpack.c.l.b16 %v622
      %v662 = vunpack.c.l.b16 %v623
      %v663 = vunpack.c.l.b16 %v624
      %v664 = vunpack.c.l.b16 %v625
      %v665 = vunpack.c.l.b16 %v626
      %v666 = vunpack.c.l.b16 %v627
      %v667 = vpack.c.b16 %v652, %v651
      %v668 = vpack.c.b16 %v654, %v653
      %v669 = vpack.c.b16 %v656, %v655
      %v670 = vpack.c.b16 %v658, %v657
      %v671 = vpack.c.b16 %v660, %v659
      %v672 = vpack.c.b16 %v662, %v661
      %v673 = vpack.c.b16 %v664, %v663
      %v674 = vpack.c.b16 %v666, %v665
      %683 = vmatprep.subr.bf16.mxu0 0
      %684 = vmatpush1.bf16.msra.mxu0 %v674
      %685 = vmatprep.subr.bf16.mxu0 0
      %686 = vmatpush1.bf16.msra.mxu0 %v673
      %687 = vmatprep.subr.bf16.mxu0 0
      %688 = vmatpush1.bf16.msra.mxu0 %v672
      %689 = vmatprep.subr.bf16.mxu0 0
      %690 = vmatpush1.bf16.msra.mxu0 %v671
      %691 = vmatprep.subr.bf16.mxu0 0
      %692 = vmatpush1.bf16.msra.mxu0 %v670
      %693 = vmatprep.subr.bf16.mxu0 0
      %694 = vmatpush1.bf16.msra.mxu0 %v669
      %695 = vmatprep.subr.bf16.mxu0 0
      %696 = vmatpush1.bf16.msra.mxu0 %v668
      %697 = vmatprep.subr.bf16.mxu0 0
      %698 = vmatpush1.bf16.msra.mxu0 %v667
      %699 = vmatprep.subr.bf16.mxu0 0
      %700 = vmatpush2.bf16.msra.mxu0 0
      %701 = vmatprep.subr.bf16.mxu0 0
      %702 = vmatpush2.bf16.msra.mxu0 0
      %703 = vmatprep.subr.bf16.mxu0 0
      %704 = vmatpush2.bf16.msra.mxu0 0
      %705 = vmatprep.subr.bf16.mxu0 0
      %706 = vmatpush2.bf16.msra.mxu0 0
      %707 = vmatprep.subr.bf16.mxu0 0
      %708 = vmatpush2.bf16.msra.mxu0 0
      %709 = vmatprep.subr.bf16.mxu0 0
      %710 = vmatpush2.bf16.msra.mxu0 0
      %711 = vmatprep.subr.bf16.mxu0 0
      %712 = vmatpush2.bf16.msra.mxu0 0
      %713 = vmatprep.subr.bf16.mxu0 0
      %714 = vmatpush2.bf16.msra.mxu0 0
      %715 = vmatprep.mubr.bf16.mxu0 0
      %716 = vmatmul.mubr.bf16.gmra.mxu0 %v608
      %v717 = vpop.f32.mrf.mxu0
      %v718 = vadd.f32 %v633, %v717
      %v719 = vpop.f32.mrf.mxu0
      %v720 = vpop.f32.mrf.mxu0
      %v721 = vadd.f32 %v633, %v720
      %v722 = vpop.f32.mrf.mxu0
      %723 = vmatprep.mubr.bf16.mxu0 0
      %724 = vmatmul.mubr.bf16.gmra.mxu0 %v609
      %v725 = vpop.f32.mrf.mxu0
      %v726 = vadd.f32 %v633, %v725
      %v727 = vpop.f32.mrf.mxu0
      %v728 = vpop.f32.mrf.mxu0
      %v729 = vadd.f32 %v633, %v728
      %v730 = vpop.f32.mrf.mxu0
      %731 = vmatprep.mubr.bf16.mxu0 0
      %732 = vmatmul.mubr.bf16.gmra.mxu0 %v610
      %v733 = vpop.f32.mrf.mxu0
      %v734 = vadd.f32 %v633, %v733
      %v735 = vpop.f32.mrf.mxu0
      %v736 = vpop.f32.mrf.mxu0
      %v737 = vadd.f32 %v633, %v736
      %v738 = vpop.f32.mrf.mxu0
      %739 = vmatprep.mubr.bf16.mxu0 0
      %740 = vmatmul.mubr.bf16.gmra.mxu0 %v611
      %v741 = vpop.f32.mrf.mxu0
      %v742 = vadd.f32 %v633, %v741
      %v743 = vpop.f32.mrf.mxu0
      %v744 = vpop.f32.mrf.mxu0
      %v745 = vadd.f32 %v633, %v744
      %v746 = vpop.f32.mrf.mxu0
      %747 = vdwg.mxu0
      %v748 = vsub.f32 0.0, %v718
      %v749 = vsub.f32 0.0, %v721
      %v750 = vsub.f32 0.0, %v726
      %v751 = vsub.f32 0.0, %v729
      %v752 = vsub.f32 0.0, %v734
      %v753 = vsub.f32 0.0, %v737
      %v754 = vsub.f32 0.0, %v742
      %v755 = vsub.f32 0.0, %v745
      %v756 = vmul.f32 %v748, 1.442695
      %v757 = vpow.pop %v756
      %v758 = vmul.f32 %v749, 1.442695
      %v759 = vpow.pop %v758
      %v760 = vmul.f32 %v750, 1.442695
      %v761 = vpow.pop %v760
      %v762 = vmul.f32 %v751, 1.442695
      %v763 = vpow.pop %v762
      %v764 = vmul.f32 %v752, 1.442695
      %v765 = vpow.pop %v764
      %v766 = vmul.f32 %v753, 1.442695
      %v767 = vpow.pop %v766
      %v768 = vmul.f32 %v754, 1.442695
      %v769 = vpow.pop %v768
      %v770 = vmul.f32 %v755, 1.442695
      %v771 = vpow.pop %v770
      %v772 = vadd.f32 %v757, 1.0
      %v773 = vadd.f32 %v759, 1.0
      %v774 = vadd.f32 %v761, 1.0
      %v775 = vadd.f32 %v763, 1.0
      %v776 = vadd.f32 %v765, 1.0
      %v777 = vadd.f32 %v767, 1.0
      %v778 = vadd.f32 %v769, 1.0
      %v779 = vadd.f32 %v771, 1.0
      %v780 = vrcp.pop %v772
      %v781 = vrcp.pop %v773
      %v782 = vrcp.pop %v774
      %v783 = vrcp.pop %v775
      %v784 = vrcp.pop %v776
      %v785 = vrcp.pop %v777
      %v786 = vrcp.pop %v778
      %v787 = vrcp.pop %v779
      %788 = vst.msk [vmem:[%s280] sm:$0xff] %vm310, %v780
      %789 = vst.msk [vmem:[%s280 + $0x8] sm:$0xff] %vm310, %v781
      %790 = vst.msk [vmem:[%s280 + $0x10] sm:$0xff] %vm310, %v782
      %791 = vst.msk [vmem:[%s280 + $0x18] sm:$0xff] %vm310, %v783
      %792 = vst.msk [vmem:[%s280 + $0x20] sm:$0xff] %vm310, %v784
      %793 = vst.msk [vmem:[%s280 + $0x28] sm:$0xff] %vm310, %v785
      %794 = vst.msk [vmem:[%s280 + $0x30] sm:$0xff] %vm310, %v786
      %795 = vst.msk [vmem:[%s280 + $0x38] sm:$0xff] %vm310, %v787
      %s796 = smul.u32 8, %s18
      %p797 = scmp.lt.s32.totalorder %s796, 31
      %s798 = scalar_select %p797, %s796, 31
      %s799 = smul.addr %s798, 8
      %s800 = scalar_lea.vmem %s7, %s799
      // Predicated region
      $region49: #{tpu_custom_call.1} parent=47 // pred_check
        %p801 = pneg %p188
      $region50: #{tpu_custom_call.1} parent=47 // pred_check_branch
        %803 = sbr.rel (%p801) target = $region52
      $region51: #{tpu_custom_call.1} parent=47 // pred_region
        %s804 = smul.u32 8, %s18
      $region52: #{tpu_custom_call.1} parent=47 // pred_fallthru
        _
    $region48: #{tpu_custom_call.1} parent=5 // pred_fallthru
      _
    %p805 = scmp.le.s32.totalorder 2, %s13
    // Predicated region
    $region53: #{tpu_custom_call.1} parent=5 // pred_check
      %p806 = pneg %p805
    $region54: #{tpu_custom_call.1} parent=5 // pred_check_branch
      %808 = sbr.rel (%p806) target = $region56
    $region55: #{tpu_custom_call.1} parent=5 // pred_region
      %s809 = ssub.s32 %s13, 2
      // Predicated region
      $region57: #{tpu_custom_call.1} parent=55 // pred_check
        %p810 = pneg %p194
      $region58: #{tpu_custom_call.1} parent=55 // pred_check_branch
        %812 = sbr.rel (%p810) target = $region60
      $region59: #{tpu_custom_call.1} parent=55 // pred_region
        %s813 = smul.u32 8, %s19
        %p814 = scmp.lt.s32.totalorder %s813, 31
        %s815 = scalar_select %p814, %s813, 31
        %s816 = smul.addr %s815, 8
        %s817 = scalar_lea.vmem %s7, %s816
      $region60: #{tpu_custom_call.1} parent=55 // pred_fallthru
        _
    $region56: #{tpu_custom_call.1} parent=5 // pred_fallthru
      _
  $region6: #{tpu_custom_call.1} parent=0 // loop_footer
    %s17 = sadd.s32 1, %s13
  $region7: #{tpu_custom_call.1} parent=0 // loop_footer_branch
    %12 = sbr.rel target = $region3
  $region8: #{tpu_custom_call.1} parent=0 // loop_exit
    _

</llo_original>
